<compile_context>
chip_gen: v6e
topology: v6e:2x2x1
jax: 0.10.0
libtpu: 0.0.40
codegen_flags: <defaults>
</compile_context>

<pallas_src>
import numpy as np
import jax
import jax.numpy as jnp
from jax import lax
from jax.experimental import pallas as pl
from jax.experimental.pallas import tpu as pltpu


_BLOCK_BYTES = 1 << 20           # ~1 MiB per input block (review: 1-4 MiB)
_VMEM_LIMIT = 32 * 1024 * 1024   # explicit scoped-VMEM budget, safe on v5e/v6e/v7x


def _axis_indices(start, end, step, n_in):
    """ONNX/PyTorch Slice semantics for one axis -> (start, step, n_out).

    Output element k reads input index start + step * k (step may be negative,
    which reproduces `_to_positive_step` + torch.flip of the reference module).
    """
    s, e, st = slice(int(start), int(end), int(step)).indices(int(n_in))
    if st > 0:
        n = max(0, (e - s + st - 1) // st)
    else:
        n = max(0, (s - e - st - 1) // (-st))
    return s, st, n


def _make_kernel(L, h, w):
    """Build the slice kernel for one static configuration.

    L : number of leading (identity, possibly chunked) dims kept in the block
    h : (start, step, n_out) for the sublane dim, relative to the block
    w : (start, step, n_out) for the lane dim
    """
    h_start, h_step, h_out = h
    w_start, w_step, w_out = w
    lead = (slice(None),) * L

    def lane_select(x):
        ax = x.ndim - 1
        if w_step == 1:
            # common contiguous case: plain static slice, zero extra work
            return lax.slice_in_dim(x, w_start, w_start + w_out, axis=ax)
        # |step| != 1 (incl. negative): per-lane static slices + one concat.
        # TODO(synk): switch to a lane gather if this path ever gets hot.
        parts = [lax.slice_in_dim(x, w_start + w_step * k,
                                  w_start + w_step * k + 1, axis=ax)
                 for k in range(w_out)]
        return parts[0] if w_out == 1 else jnp.concatenate(parts, axis=ax)

    def kernel(x_ref, o_ref):
        if h_step > 0:
            if h_step == 1:
                xh = x_ref[lead + (pl.ds(h_start, h_out), slice(None))]
            else:
                xh = x_ref[lead + (pl.ds(h_start, h_out, stride=h_step),
                                   slice(None))]
            o_ref[...] = lane_select(xh).astype(o_ref.dtype)
        else:
            # negative sublane step (rare): stream one dynamic row per output
            # row through a fori_loop -- no concat chain, no vreg blow-up.
            def body(k, carry):
                row = h_start + h_step * k
                xr = x_ref[lead + (pl.ds(row, 1), slice(None))]
                o_ref[lead + (pl.ds(k, 1), slice(None))] = (
                    lane_select(xr).astype(o_ref.dtype))
                return carry
            lax.fori_loop(0, h_out, body, 0)

    return kernel


def pallas_slice(data, starts, ends, axes=None, steps=None):
    data = jnp.asarray(data)
    ndim = data.ndim
    if ndim == 0:
        return data
    if ndim == 1:
        # kernel wants >= 2-D; add a unit leading dim (pure metadata reshape)
        n = 1 if axes is None else len(list(axes))
        out = pallas_slice(data[None, :], starts, ends, [1] * n, steps)
        return out[0]

    if axes is None:
        axes = list(range(len(starts)))
    if steps is None:
        steps = [1] * len(axes)
    axes = [int(a) + ndim if int(a) < 0 else int(a) for a in axes]

    # default: identity along every axis
    ax_start = [0] * ndim
    ax_step = [1] * ndim
    ax_n = list(data.shape)
    for i, ax in enumerate(axes):
        s, st, n = _axis_indices(starts[i], ends[i], steps[i], data.shape[ax])
        ax_start[ax], ax_step[ax], ax_n[ax] = s, st, n

    out_shape = tuple(ax_n)
    if any(d == 0 for d in out_shape):
        # ONNX permits empty slices; no kernel launch needed.
        return jnp.zeros(out_shape, data.dtype)

    n_lead = ndim - 2
    H, W = data.shape[-2], data.shape[-1]
    itemsize = jnp.dtype(data.dtype).itemsize
    h_start, h_step, h_out = ax_start[-2], ax_step[-2], ax_n[-2]
    w_start, w_step, w_out = ax_start[-1], ax_step[-1], ax_n[-1]

    ident = [ax_start[ax] == 0 and ax_step[ax] == 1 and ax_n[ax] == data.shape[ax]
             for ax in range(n_lead)]
    h_ident = (h_start == 0 and h_step == 1 and h_out == H)

    # ---- row blocking: stream identity rows of large images through the grid
    base_bytes = H * W * itemsize
    row_block = H
    if h_ident and H % 8 == 0 and base_bytes > _BLOCK_BYTES:
        row_block = 8
        for rb in range(8, H + 1, 8):       # multiple of 8, divides H, fits
            if H % rb == 0 and rb * W * itemsize <= _BLOCK_BYTES:
                row_block = rb
    split_rows = row_block != H

    # ---- chunked folding of identity leading axes under the byte budget
    blk = [None] * n_lead        # None => squeezed grid axis; int => in block
    cur = row_block * W * itemsize
    for ax in range(n_lead - 1, -1, -1):
        if not ident[ax]:
            continue             # sliced leading axes stay on the grid
        n = data.shape[ax]
        if cur * n <= _BLOCK_BYTES:
            blk[ax] = n          # fold the whole axis
            cur *= n
        else:
            best = 1             # largest divisor of n that still fits
            for d in range(1, n + 1):
                if n % d == 0 and cur * d <= _BLOCK_BYTES:
                    best = d
            blk[ax] = best
            cur *= best

    # ---- grid & index maps (every grid step writes a disjoint output block)
    grid = []
    lead_pos = [0] * n_lead
    for ax in range(n_lead):
        lead_pos[ax] = len(grid)
        if blk[ax] is None:
            grid.append(ax_n[ax])                     # one selected index/step
        else:
            grid.append(data.shape[ax] // blk[ax])    # chunked identity axis
    row_pos = None
    if split_rows:
        row_pos = len(grid)
        grid.append(H // row_block)
    if not grid:
        grid.append(1)
    grid = tuple(grid)

    def x_index_map(*g):
        idx = []
        for ax in range(n_lead):
            gi = g[lead_pos[ax]]
            idx.append(ax_start[ax] + ax_step[ax] * gi if blk[ax] is None else gi)
        idx.append(g[row_pos] if split_rows else 0)
        idx.append(0)
        return tuple(idx)

    def o_index_map(*g):
        idx = [g[lead_pos[ax]] for ax in range(n_lead)]
        idx.append(g[row_pos] if split_rows else 0)
        idx.append(0)
        return tuple(idx)

    x_block = tuple(blk) + (row_block, W)
    o_block = tuple(blk) + (row_block if split_rows else h_out, w_out)
    L = sum(1 for b in blk if b is not None)

    h_cfg = (0, 1, row_block) if split_rows else (h_start, h_step, h_out)
    kernel = _make_kernel(L=L, h=h_cfg, w=(w_start, w_step, w_out))

    return pl.pallas_call(
        kernel,
        out_shape=jax.ShapeDtypeStruct(out_shape, data.dtype),
        grid=grid,
        in_specs=[pl.BlockSpec(x_block, x_index_map)],
        out_specs=pl.BlockSpec(o_block, o_index_map),
        compiler_params=pltpu.CompilerParams(
            dimension_semantics=("parallel",) * len(grid),
            vmem_limit_bytes=_VMEM_LIMIT),
    )(data)


def _reference_slice(data_np, starts, ends, axes, steps):
    ndim = data_np.ndim
    axes = [int(a) + ndim if int(a) < 0 else int(a) for a in axes]
    out = data_np
    for i, ax in enumerate(axes):
        s, st, n = _axis_indices(starts[i], ends[i], steps[i], data_np.shape[ax])
        idx = s + st * np.arange(n)
        out = np.take(out, idx, axis=ax)
    return out


if __name__ == "__main__":
    key = jax.random.PRNGKey(0)
    k1, k2, k3, k4 = jax.random.split(key, 4)
    x = jax.random.normal(k1, (2, 4, 16, 16), dtype=jnp.float32)  # NCHW

    def check(data, starts, ends, axes, steps):
        out = jax.block_until_ready(
            pallas_slice(data, starts, ends, axes=axes, steps=steps))
        ref = _reference_slice(np.asarray(data), starts, ends, axes, steps)
        assert out.shape == ref.shape, (out.shape, ref.shape)
        # every path is a pure gather/copy now -> bit-exact for all dtypes
        np.testing.assert_array_equal(np.asarray(out), np.asarray(ref))

    # 1) flip on C (affine grid index_map), strided rows (strided pl.ds),
    #    reverse-strided cols (per-lane slice + concat; never touches the MXU).
    check(x, [3, 2, 15], [0, 14, 0], [1, 2, 3], [-1, 2, -2])

    # 2) identity leading axes folded into the block, strided rows (pl.ds),
    #    contiguous cols (static slice).
    check(x, [0, 1, 4], [2, 100, 12], [0, 2, 3], [1, 3, 1])

    # 3) reversed rows (negative sublane step): fori_loop row copy path.
    check(x, [15, 2], [0, 14], [2, 3], [-2, 1])

    # 4) int32: dtype-preserving copy path, leading identity axes folded.
    xi = jax.random.randint(k2, (2, 4, 16, 16), -2**30, 2**30, dtype=jnp.int32)
    check(xi, [1, 2], [16, 14], [2, 3], [2, 1])

    # 5) bf16 strided lanes: bit-exact copy path (no f32 upcast, no MXU).
    xb = jax.random.normal(k3, (2, 4, 16, 16), dtype=jnp.bfloat16)
    check(xb, [0], [16], [3], [2])

    # 6) larger image: identity rows are row-blocked onto the grid and the
    #    identity leading axes are chunk-folded into ~1 MiB pipelined blocks.
    xl = jax.random.normal(k4, (1, 2, 1024, 512), dtype=jnp.float32)
    check(xl, [128], [384], [3], [1])

    # 7) empty ONNX slice -> zero-size output, no kernel launch.
    check(x, [5], [5], [2], [1])

    print("KERNEL_OK")
</pallas_src>

<mosaic_0001>
module attributes {stable_mosaic.version = 11 : i64} {
  func.func @kernel(%arg0: i32, %arg1: i32, %arg2: memref<2x1x16x16xf32, #tpu.memory_space<vmem>>, %arg3: memref<2x1x6x8xf32, #tpu.memory_space<vmem>>) attributes {dimension_semantics = [#tpu.dimension_semantics<parallel>, #tpu.dimension_semantics<parallel>], iteration_bounds = array<i64: 1, 3>, scalar_prefetch = 0 : i64, scratch_operands = 0 : i64, tpu.core_type = #tpu.core_type<tc>, window_params = [{transform_indices = @transform_0, window_bounds = array<i64: 2, 1, 16, 16>}, {transform_indices = @transform_1, window_bounds = array<i64: 2, 1, 6, 8>}]} {
    %c0 = arith.constant 0 : index
    %c0_0 = arith.constant 0 : index
    %c2 = arith.constant 2 : index
    %c0_1 = arith.constant 0 : index
    %0 = tpu.strided_load %arg2[%c0, %c0_0, %c2, %c0_1] {strides = array<i32: 1, 1, 2, 1>} : memref<2x1x16x16xf32, #tpu.memory_space<vmem>>, vector<2x1x6x16xf32>
    %1 = vector.shape_cast %0 : vector<2x1x6x16xf32> to vector<2x6x16xf32>
    %2 = vector.extract_strided_slice %1 {offsets = [0, 0, 15], sizes = [2, 6, 1], strides = [1, 1, 1]} : vector<2x6x16xf32> to vector<2x6x1xf32>
    %3 = vector.extract_strided_slice %1 {offsets = [0, 0, 13], sizes = [2, 6, 1], strides = [1, 1, 1]} : vector<2x6x16xf32> to vector<2x6x1xf32>
    %4 = vector.extract_strided_slice %1 {offsets = [0, 0, 11], sizes = [2, 6, 1], strides = [1, 1, 1]} : vector<2x6x16xf32> to vector<2x6x1xf32>
    %5 = vector.extract_strided_slice %1 {offsets = [0, 0, 9], sizes = [2, 6, 1], strides = [1, 1, 1]} : vector<2x6x16xf32> to vector<2x6x1xf32>
    %6 = vector.extract_strided_slice %1 {offsets = [0, 0, 7], sizes = [2, 6, 1], strides = [1, 1, 1]} : vector<2x6x16xf32> to vector<2x6x1xf32>
    %7 = vector.extract_strided_slice %1 {offsets = [0, 0, 5], sizes = [2, 6, 1], strides = [1, 1, 1]} : vector<2x6x16xf32> to vector<2x6x1xf32>
    %8 = vector.extract_strided_slice %1 {offsets = [0, 0, 3], sizes = [2, 6, 1], strides = [1, 1, 1]} : vector<2x6x16xf32> to vector<2x6x1xf32>
    %9 = vector.extract_strided_slice %1 {offsets = [0, 0, 1], sizes = [2, 6, 1], strides = [1, 1, 1]} : vector<2x6x16xf32> to vector<2x6x1xf32>
    %10 = tpu.concatenate %2, %3, %4, %5, %6, %7, %8, %9 in 2 : vector<2x6x1xf32>, vector<2x6x1xf32>, vector<2x6x1xf32>, vector<2x6x1xf32>, vector<2x6x1xf32>, vector<2x6x1xf32>, vector<2x6x1xf32>, vector<2x6x1xf32> -> vector<2x6x8xf32>
    %c0_2 = arith.constant 0 : index
    %c0_3 = arith.constant 0 : index
    %c0_4 = arith.constant 0 : index
    %c0_5 = arith.constant 0 : index
    %11 = vector.load %arg3[%c0_2, %c0_3, %c0_4, %c0_5] : memref<2x1x6x8xf32, #tpu.memory_space<vmem>>, vector<2x1x6x8xf32>
    %12 = vector.shape_cast %11 : vector<2x1x6x8xf32> to vector<2x6x8xf32>
    %13 = vector.shape_cast %10 : vector<2x6x8xf32> to vector<2x1x6x8xf32>
    tpu.vector_store %arg3[%c0_2, %c0_3, %c0_4, %c0_5], %13 {strides = array<i32>} : memref<2x1x6x8xf32, #tpu.memory_space<vmem>>, vector<2x1x6x8xf32>,
    return
  }
  func.func @transform_0(%arg0: i32, %arg1: i32) -> (i32, i32, i32, i32) {
    %c-1_i32 = arith.constant -1 : i32
    %0 = arith.muli %c-1_i32, %arg1 : i32
    %c3_i32 = arith.constant 3 : i32
    %1 = arith.addi %c3_i32, %0 : i32
    %c0_i32 = arith.constant 0 : i32
    %c0_i32_0 = arith.constant 0 : i32
    %c0_i32_1 = arith.constant 0 : i32
    return %arg0, %1, %c0_i32, %c0_i32_0 : i32, i32, i32, i32
  }
  func.func @transform_1(%arg0: i32, %arg1: i32) -> (i32, i32, i32, i32) {
    %c0_i32 = arith.constant 0 : i32
    %c0_i32_0 = arith.constant 0 : i32
    %c0_i32_1 = arith.constant 0 : i32
    return %arg0, %arg1, %c0_i32, %c0_i32_0 : i32, i32, i32, i32
  }
}

</mosaic_0001>

<llo_original>
// kernel: tpu_custom_call.1
$region0: #{tpu_custom_call.1}
  #allocation0 [shape = 'u32[]', space=smem, size = 0x4, offset = 0x4, fixed_abs, tag = 'smem constant byte address 0x4 - core index']
  #allocation1 [shape = 'u32[144,128]{1,0:T(1,128)}', space=vmem, size = 0x12000, scoped, tag = 'internal scratch']
  #allocation5 [shape = 's32[]', space=sflag, size = 0x4, offset = 0, fixed_abs, tag = 'sflag constant byte address 0x0 - dummy sync flag']
  %s0 = inlined_call_operand.hbm [shape: f32[2,4,16,16], index: 0, kind: input, shape index: {}]
  %s1 = inlined_call_operand.vmem [shape: f32[2,3,6,8], index: 1, kind: output, shape index: {}]
  %s2 = sld [smem:[#allocation0]]
  $region75: #{tpu_custom_call.1} parent=0
    _
  %s4 = ssub.s32 1, %s2
  %s5 = scalar_select 0, %s4, %s2
  $region1: #{tpu_custom_call.1} parent=0
    #allocation2 [shape = 'u8[32768]{0}', space=vmem, size = 0x8000, scoped, tag = 'input window, operand 0']
    #allocation3 [shape = 's32[2]{0}', space=sflag, size = 0x8, scoped, tag = 'scoped memory for tpu_custom_call.1']
    #allocation4 [shape = 'u8[16384]{0}', space=vmem, size = 0x4000, scoped, tag = 'output window, operand 0']
    %6 = vsyncpa [#allocation3], 0
    %s7 = scalar_lea.sflag [#allocation3], 1
    %8 = vsyncpa %s7, 0
    loop: start=0, step=1, limit=5
    $region2: #{tpu_custom_call.1} parent=1 // loop_pre_header
      _
    $region3: #{tpu_custom_call.1} parent=1 // loop_header
      %s10 = sphi 0, %s14
      %p11 = scmp.ge.s32.totalorder %s10, 5
      %s17 = sphi 0, %s29
      %s18 = sphi 0, %s25
      %s19 = sphi 0, %s17
      %s20 = sphi 0, %s18
      %s21 = sphi 0, %s19
      %s22 = sphi 0, %s20
      %s36 = sphi 0, %s38
      %s39 = sphi 0, %s36
      %s40 = sphi 0, %s39
      %s56 = sphi 0, %s40
      %s64 = sphi 0, %s66
      %s67 = sphi 0, %s64
      %s68 = sphi 0, %s67
      %s84 = sphi 0, %s68
    $region4: #{tpu_custom_call.1} parent=1 // loop_header_branch
      %13 = sbr.rel (%p11) target = $region8
    $region5: #{tpu_custom_call.1} parent=1 // loop_body
      %s15 = ssub.s32 %s10, 1
      %s16 = ssub.s32 %s10, 2
      %s23 = sadd.s32 1, %s18
      %p24 = scmp.ge.s32.totalorder %s23, 3
      %s25 = scalar_select %p24, 0, %s23
      %s26 = sadd.s32 1, %s17
      %s27 = scalar_select %p24, %s26, %s17
      %p28 = scmp.ge.s32.totalorder %s27, 1
      %s29 = scalar_select %p28, 0, %s27
      %s30 = ssub.s32 3, %s18
      %s31 = ssub.s32 3, %s25
      %s32 = ssub.s32 %s17, %s29
      %s33 = ssub.s32 %s30, %s31
      %s34 = sor.u32 %s32, %s33
      %p35 = scmp.eq.s32.totalorder %s34, 0
      %s37 = sadd.s32 %s36, 1
      %s38 = scalar_select %p35, %s36, %s37
      %p41 = pneg %p35
      %p42 = scmp.eq.s32.totalorder %s10, 2
      %p43 = por %p41, %p42
      %p44 = scmp.ne.s32.totalorder %s36, %s39
      %p45 = scmp.eq.s32.totalorder %s10, 0
      %p46 = por %p44, %p45
      %p47 = scmp.ne.s32.totalorder %s36, %s39
      %p48 = scmp.eq.s32.totalorder %s15, 2
      %p49 = por %p47, %p48
      %p50 = scmp.ne.s32.totalorder %s39, %s40
      %p51 = scmp.eq.s32.totalorder %s15, 0
      %p52 = por %p50, %p51
      %p53 = scmp.ne.s32.totalorder %s39, %s40
      %p54 = scmp.eq.s32.totalorder %s16, 2
      %p55 = por %p53, %p54
      %p57 = scmp.ne.s32.totalorder %s40, %s56
      %p58 = scmp.eq.s32.totalorder %s16, 0
      %p59 = por %p57, %p58
      %s60 = ssub.s32 %s17, %s29
      %s61 = ssub.s32 %s18, %s25
      %s62 = sor.u32 %s60, %s61
      %p63 = scmp.eq.s32.totalorder %s62, 0
      %s65 = sadd.s32 %s64, 1
      %s66 = scalar_select %p63, %s64, %s65
      %p69 = pneg %p63
      %p70 = scmp.eq.s32.totalorder %s10, 2
      %p71 = por %p69, %p70
      %p72 = scmp.ne.s32.totalorder %s64, %s67
      %p73 = scmp.eq.s32.totalorder %s10, 0
      %p74 = por %p72, %p73
      %p75 = scmp.ne.s32.totalorder %s64, %s67
      %p76 = scmp.eq.s32.totalorder %s15, 2
      %p77 = por %p75, %p76
      %p78 = scmp.ne.s32.totalorder %s67, %s68
      %p79 = scmp.eq.s32.totalorder %s15, 0
      %p80 = por %p78, %p79
      %p81 = scmp.ne.s32.totalorder %s67, %s68
      %p82 = scmp.eq.s32.totalorder %s16, 2
      %p83 = por %p81, %p82
      %p85 = scmp.ne.s32.totalorder %s68, %s84
      %p86 = scmp.eq.s32.totalorder %s16, 0
      %p87 = por %p85, %p86
      %p88 = scmp.le.s32.totalorder 1, %s10
      %p89 = scmp.lt.s32.totalorder %s10, 4
      %p90 = pnand %p88, %p89
      %p91 = pneg %p90
      // Predicated region
      $region9: #{tpu_custom_call.1} parent=5 // pred_check
        _
      $region10: #{tpu_custom_call.1} parent=5 // pred_check_branch
        %93 = sbr.rel (%p90) target = $region12
      $region11: #{tpu_custom_call.1} parent=5 // pred_region
        %s94 = ssub.s32 %s10, 1
      $region12: #{tpu_custom_call.1} parent=5 // pred_fallthru
        _
      %p95 = scmp.lt.s32.totalorder %s10, 3
      // Predicated region
      $region13: #{tpu_custom_call.1} parent=5 // pred_check
        %p96 = pneg %p95
      $region14: #{tpu_custom_call.1} parent=5 // pred_check_branch
        %98 = sbr.rel (%p96) target = $region16
      $region15: #{tpu_custom_call.1} parent=5 // pred_region
        // Predicated region
        $region17: #{tpu_custom_call.1} parent=15 // pred_check
          %p99 = pneg %p46
        $region18: #{tpu_custom_call.1} parent=15 // pred_check_branch
          %101 = sbr.rel (%p99) target = $region20
        $region19: #{tpu_custom_call.1} parent=15 // pred_region
          #allocation6 [shape = 'u32[6]{0}', space=smem, size = 0x18, scoped, tag = 'DMA stride descriptor']
          %s102 = sand.u32 %s36, 1
          %s103 = scalar_lea.sflag [#allocation3], %s102
          %s104 = sand.u32 %s36, 1
          %s105 = smul.addr %s104, 32
          %s106 = scalar_lea.vmem [#allocation2], %s105
          %s107 = ssub.s32 3, %s18
          %s108 = smul.u32 2, %s17
          %s110 = ssub.s32 512, 512
          %111 = vsyncadd %s103, %s110
          %s112 = smul.addr %s107, 2
          %s113 = smul.addr %s108, 8
          %s114 = sadd.s32 %s112, %s113
          %s115 = smul.addr %s114, 128
          %s116 = scalar_lea.hbm %s0, %s115
          %s118 = sshll.u32 1, 14
          %s119 = sxor.u32 4294967295, %s118
          %s121 = sld [smem:[#allocation0]]
          %s122 = sadd.s32 2, %s121
          %s124 = sshll.u32 7, 26
          %s125 = sxor.u32 4294967295, %s124
          %s126 = sand.u32 0, %s125
          %s127 = sshll.u32 %s122, 26
          %s128 = sor.u32 %s126, %s127
          %s129 = sshll.u32 %s106, 4
          %s130 = int_to_ptr.vmem [resolvable:$true] %s129
          %136 = sst [smem:[#allocation6]] 1024
          %s137 = scalar_lea.smem [#allocation6], 1
          %138 = sst [smem:[%s137]] 256
          %s139 = scalar_lea.smem [#allocation6], 2
          %140 = sst [smem:[%s139]] 2
          %s141 = scalar_lea.smem [#allocation6], 3
          %142 = sst [smem:[%s141]] 128
          %s143 = scalar_lea.smem [#allocation6], 4
          %144 = sst [smem:[%s143]] 128
          %s145 = scalar_lea.smem [#allocation6], 5
          %146 = sst [smem:[%s145]] 8
          %148 = dma.general %s116, 512, %s130, %s103, 131072, [#allocation6], %s128, 0
        $region20: #{tpu_custom_call.1} parent=15 // pred_fallthru
          _
      $region16: #{tpu_custom_call.1} parent=5 // pred_fallthru
        _
      %p149 = scmp.le.s32.totalorder 1, %s10
      %p150 = scmp.lt.s32.totalorder %s10, 4
      %p151 = pnand %p149, %p150
      %p152 = pneg %p151
      // Predicated region
      $region21: #{tpu_custom_call.1} parent=5 // pred_check
        _
      $region22: #{tpu_custom_call.1} parent=5 // pred_check_branch
        %154 = sbr.rel (%p151) target = $region24
      $region23: #{tpu_custom_call.1} parent=5 // pred_region
        %s155 = ssub.s32 %s10, 1
        %s156 = sand.u32 %s39, 1
        %s157 = scalar_lea.sflag [#allocation3], %s156
        %s158 = sand.u32 %s39, 1
        %s159 = smul.addr %s158, 32
        %s160 = scalar_lea.vmem [#allocation2], %s159
        // Predicated region
        $region25: #{tpu_custom_call.1} parent=23 // pred_check
          %p161 = pneg %p52
        $region26: #{tpu_custom_call.1} parent=23 // pred_check_branch
          %163 = sbr.rel (%p161) target = $region28
        $region27: #{tpu_custom_call.1} parent=23 // pred_region
          %164 = dma.done %s157, 512
        $region28: #{tpu_custom_call.1} parent=23 // pred_fallthru
          _
        %s165 = sand.u32 %s39, 1
        %s166 = scalar_lea.sflag [#allocation3], %s165
        %s167 = sand.u32 %s39, 1
        %s168 = smul.addr %s167, 32
        %s169 = scalar_lea.vmem [#allocation2], %s168
        %p170 = pneg %p52
        %p171 = pneg %p49
        %p172 = pneg %p80
        %p173 = pneg %p77
        %s174 = sand.u32 %s67, 1
        %s175 = sand.u32 %s67, 1
        %s176 = smul.addr %s175, 16
        %s177 = scalar_lea.vmem [#allocation4], %s176
        %s178 = ssub.s32 3, %s20
        %s179 = smul.u32 2, %s19
        %s180 = smul.u32 2, %s19
        %s181 = scalar_lea.vmem %s160, 2 [#allocation2]
        %v182 = vld [vmem:[%s181] ss:$2 sm:$0x3f]
        %s183 = scalar_lea.vmem %s160, 18 [#allocation2]
        %v184 = vld [vmem:[%s183] ss:$2 sm:$0x3f]
        %187 = vrot.lane.b32.xlu0 %v182, 113
        %v188 = vpop.permute.xlu0 %187
        %189 = vrot.lane.b32.xlu0 %v184, 113
        %v190 = vpop.permute.xlu0 %189
        %193 = vrot.lane.b32.xlu0 %v182, 116
        %v194 = vpop.permute.xlu0 %193
        %195 = vrot.lane.b32.xlu0 %v184, 116
        %v196 = vpop.permute.xlu0 %195
        %199 = vrot.lane.b32.xlu0 %v182, 119
        %v200 = vpop.permute.xlu0 %199
        %201 = vrot.lane.b32.xlu0 %v184, 119
        %v202 = vpop.permute.xlu0 %201
        %205 = vrot.lane.b32.xlu0 %v182, 122
        %v206 = vpop.permute.xlu0 %205
        %207 = vrot.lane.b32.xlu0 %v184, 122
        %v208 = vpop.permute.xlu0 %207
        %211 = vrot.lane.b32.xlu0 %v182, 125
        %v212 = vpop.permute.xlu0 %211
        %213 = vrot.lane.b32.xlu0 %v184, 125
        %v214 = vpop.permute.xlu0 %213
        %217 = vrot.lane.b32.xlu0 %v182, 3
        %v218 = vpop.permute.xlu0 %217
        %219 = vrot.lane.b32.xlu0 %v184, 3
        %v220 = vpop.permute.xlu0 %219
        %223 = vrot.lane.b32.xlu0 %v182, 6
        %v224 = vpop.permute.xlu0 %223
        %225 = vrot.lane.b32.xlu0 %v184, 6
        %v226 = vpop.permute.xlu0 %225
        %vm229 = vcmask 7168
        %v230 = vsel %vm229, %v188, %v194
        %v231 = vsel %vm229, %v190, %v196
        %vm232 = vcmask 15360
        %v233 = vsel %vm232, %v230, %v200
        %v234 = vsel %vm232, %v231, %v202
        %vm235 = vcmask 23552
        %v236 = vsel %vm235, %v233, %v206
        %v237 = vsel %vm235, %v234, %v208
        %vm238 = vcmask 31744
        %v239 = vsel %vm238, %v236, %v212
        %v240 = vsel %vm238, %v237, %v214
        %vm241 = vcmask 39936
        %v242 = vsel %vm241, %v239, %v182
        %v243 = vsel %vm241, %v240, %v184
        %vm244 = vcmask 48128
        %v245 = vsel %vm244, %v242, %v218
        %v246 = vsel %vm244, %v243, %v220
        %vm247 = vcmask 56320
        %v248 = vsel %vm247, %v245, %v224
        %v249 = vsel %vm247, %v246, %v226
        %vm250 = vcmask 62464
        %251 = vst.msk [vmem:[%s177] sm:$0x3f] %vm250, %v248
        %252 = vst.msk [vmem:[%s177 + $0x8] sm:$0x3f] %vm250, %v249
        %s253 = sand.u32 %s67, 1
        %s254 = sand.u32 %s67, 1
        %s255 = smul.addr %s254, 16
        %s256 = scalar_lea.vmem [#allocation4], %s255
        // Predicated region
        $region29: #{tpu_custom_call.1} parent=23 // pred_check
          %p257 = pneg %p77
        $region30: #{tpu_custom_call.1} parent=23 // pred_check_branch
          %259 = sbr.rel (%p257) target = $region32
        $region31: #{tpu_custom_call.1} parent=23 // pred_region
          %s260 = smul.u32 2, %s19
          %s261 = smul.addr %s260, 3
          %s262 = sadd.s32 %s20, %s261
          %s263 = smul.addr %s262, 8
          %s264 = scalar_lea.vmem %s1, %s263
          // Predicated region
          $region33: #{tpu_custom_call.1} parent=31 // pred_check
            _
          $region34: #{tpu_custom_call.1} parent=31 // pred_check_branch
            %266 = sbr.rel (0) target = $region36
          $region35: #{tpu_custom_call.1} parent=31 // pred_region
            // Predicated region
            $region37: #{tpu_custom_call.1} parent=35 // pred_check
              _
            $region38: #{tpu_custom_call.1} parent=35 // pred_check_branch
              %268 = sbr.rel (0) target = $region40
            $region39: #{tpu_custom_call.1} parent=35 // pred_region
              // Predicated region
              $region52: #{tpu_custom_call.1} parent=39 // pred_check
                _
              $region53: #{tpu_custom_call.1} parent=39 // pred_check_branch
                %286 = sbr.rel (0) target = $region55
              $region54: #{tpu_custom_call.1} parent=39 // pred_region
                loop: start=0, step=1, limit=1
                $region56: #{tpu_custom_call.1} parent=54 // loop_pre_header
                  _
                $region57: #{tpu_custom_call.1} parent=54 // loop_header
                  %s288 = sphi 0, %s292
                  %p289 = scmp.ge.s32.totalorder %s288, 1
                  %s293 = sphi %s256, %s256
                  %s294 = sphi %s264, %s264
                $region58: #{tpu_custom_call.1} parent=54 // loop_header_branch
                  %291 = sbr.rel (%p289) target = $region62
                $region59: #{tpu_custom_call.1} parent=54 // loop_body
                  %v295 = vld [vmem:[%s293] sm:$0xff]
                  %296 = vst [vmem:[%s294] sm:$0xff] %v295
                  %v297 = vld [vmem:[%s293 + $0x8] sm:$0xff]
                  %298 = vst [vmem:[%s294 + $0x18] sm:$0xff] %v297
                $region60: #{tpu_custom_call.1} parent=54 // loop_footer
                  %s292 = sadd.s32 1, %s288
                $region61: #{tpu_custom_call.1} parent=54 // loop_footer_branch
                  %287 = sbr.rel target = $region57
                $region62: #{tpu_custom_call.1} parent=54 // loop_exit
                  _
              $region55: #{tpu_custom_call.1} parent=39 // pred_fallthru
                _
              // Predicated region
              $region63: #{tpu_custom_call.1} parent=39 // pred_check
                _
              $region64: #{tpu_custom_call.1} parent=39 // pred_check_branch
                %300 = sbr.rel target = $region66
              $region65: #{tpu_custom_call.1} parent=39 // pred_region
                _
              $region66: #{tpu_custom_call.1} parent=39 // pred_fallthru
                _
            $region40: #{tpu_custom_call.1} parent=35 // pred_fallthru
              _
            // Predicated region
            $region41: #{tpu_custom_call.1} parent=35 // pred_check
              _
            $region42: #{tpu_custom_call.1} parent=35 // pred_check_branch
              %270 = sbr.rel target = $region44
            $region43: #{tpu_custom_call.1} parent=35 // pred_region
              %s272 = ssub.s32 256, 1
              loop: start=0, step=1, limit=1
              $region45: #{tpu_custom_call.1} parent=43 // loop_pre_header
                _
              $region46: #{tpu_custom_call.1} parent=43 // loop_header
                %s274 = sphi 0, %s278
                %p275 = scmp.ge.s32.totalorder %s274, 1
                %s279 = sphi %s256, %s256
                %s280 = sphi %s264, %s264
              $region47: #{tpu_custom_call.1} parent=43 // loop_header_branch
                %277 = sbr.rel (%p275) target = $region51
              $region48: #{tpu_custom_call.1} parent=43 // loop_body
                %v281 = vld [vmem:[%s279] sm:%s272]
                %282 = vst [vmem:[%s280] sm:%s272] %v281
                %v283 = vld [vmem:[%s279 + $0x8] sm:%s272]
                %284 = vst [vmem:[%s280 + $0x18] sm:%s272] %v283
              $region49: #{tpu_custom_call.1} parent=43 // loop_footer
                %s278 = sadd.s32 1, %s274
              $region50: #{tpu_custom_call.1} parent=43 // loop_footer_branch
                %273 = sbr.rel target = $region46
              $region51: #{tpu_custom_call.1} parent=43 // loop_exit
                _
            $region44: #{tpu_custom_call.1} parent=35 // pred_fallthru
              _
          $region36: #{tpu_custom_call.1} parent=31 // pred_fallthru
            _
          %301 = vnop
        $region32: #{tpu_custom_call.1} parent=23 // pred_fallthru
          _
      $region24: #{tpu_custom_call.1} parent=5 // pred_fallthru
        _
      %p302 = scmp.le.s32.totalorder 2, %s10
      // Predicated region
      $region67: #{tpu_custom_call.1} parent=5 // pred_check
        %p303 = pneg %p302
      $region68: #{tpu_custom_call.1} parent=5 // pred_check_branch
        %305 = sbr.rel (%p303) target = $region70
      $region69: #{tpu_custom_call.1} parent=5 // pred_region
        %s306 = ssub.s32 %s10, 2
        // Predicated region
        $region71: #{tpu_custom_call.1} parent=69 // pred_check
          %p307 = pneg %p83
        $region72: #{tpu_custom_call.1} parent=69 // pred_check_branch
          %309 = sbr.rel (%p307) target = $region74
        $region73: #{tpu_custom_call.1} parent=69 // pred_region
          %s310 = sand.u32 %s68, 1
          %s311 = sand.u32 %s68, 1
          %s312 = smul.addr %s311, 16
          %s313 = scalar_lea.vmem [#allocation4], %s312
        $region74: #{tpu_custom_call.1} parent=69 // pred_fallthru
          _
      $region70: #{tpu_custom_call.1} parent=5 // pred_fallthru
        _
    $region6: #{tpu_custom_call.1} parent=1 // loop_footer
      %s14 = sadd.s32 1, %s10
    $region7: #{tpu_custom_call.1} parent=1 // loop_footer_branch
      %9 = sbr.rel target = $region3
    $region8: #{tpu_custom_call.1} parent=1 // loop_exit
      _
    %314 = vsyncpa [#allocation3], 1
    %s315 = scalar_lea.sflag [#allocation3], 1
    %316 = vsyncpa %s315, 1

</llo_original>
